<compile_context>
chip_gen: v6e
topology: v6e:2x2x1
jax: 0.10.0
libtpu: 0.0.40
codegen_flags: <defaults>
</compile_context>

<pallas_src>
import jax
import jax.numpy as jnp
from jax.experimental import pallas as pl
from jax.experimental.pallas import tpu as pltpu


def _classifier_kernel(x_ref, w1t_ref, b1c_ref, pool_ref, w2_ref, b2_ref, o_ref):
    """One batch tile per grid step.

    x_ref   : (C, B_TILE*P)       f32  pixels of the tile, lane-dense
    w1t_ref : (HID, C)            f32  1x1-conv weight, pre-transposed
    b1c_ref : (HID, 1)            f32  conv bias as a column (broadcasts over lanes)
    pool_ref: (B_TILE*P, B_TILE)  f32  block-diagonal avg-pool matrix (1/P folded in)
    w2_ref  : (HID, NCLS)         f32  fc-head weight
    b2_ref  : (1, NCLS)           f32
    o_ref   : (B_TILE, NCLS)      f32  logits slab for this tile
    """
    # Pointwise conv over the whole tile: one MXU matmul, lanes = B_TILE*P.
    h = jnp.dot(w1t_ref[...], x_ref[...],
                preferred_element_type=jnp.float32)          # (HID, B_TILE*P)
    h = jnp.maximum(h + b1c_ref[...], 0.0)                   # bias + ReLU (f32 VPU)

    # Global average pool on the MXU: block-diagonal pooling matrix, 1/P pre-folded.
    pooled = jnp.dot(h, pool_ref[...],
                     preferred_element_type=jnp.float32)     # (HID, B_TILE)

    # FC head: contract the HID axis of pooled (axis 0) with w2 (axis 0) -> (B_TILE, NCLS).
    logits = jax.lax.dot_general(
        pooled, w2_ref[...],
        dimension_numbers=(((0,), (0,)), ((), ())),
        preferred_element_type=jnp.float32)
    o_ref[...] = (logits + b2_ref[...]).astype(o_ref.dtype)


@jax.jit
def _ir_model_pallas(x_nchw, w1, b1, w2, b2):
    """Synthetic ir_model (+ fused squeeze): returns logits of shape (N, num_classes)."""
    n, c, h, w = x_nchw.shape
    p = h * w
    hid = w1.shape[1]
    ncls = w2.shape[1]

    # Batch tiling: one grid step for the whole batch when it fits comfortably.
    # Per-sample f32 VMEM: x block (C*P) + conv intermediate (HID*P) ~= 36 KB, plus a
    # (B_TILE*P, B_TILE) pool matrix (~1 MB at B_TILE=32) — far under the 32 MiB scoped
    # default even on v7x (64 MiB physical).  For larger batches use 32-sample tiles
    # (multiple of 8 -> sublane-aligned output blocks).
    MAX_B_TILE = 32
    b_tile = n if n <= MAX_B_TILE else MAX_B_TILE
    n_tiles = pl.cdiv(n, b_tile)
    n_pad = n_tiles * b_tile

    # Single pass over the image: NCHW -> (C, N*P).  This is the only wrapper-side
    # touch of the large tensor (no separate cast, no pad copy for the common case).
    x_cnp = jnp.transpose(x_nchw.reshape(n, c, p), (1, 0, 2)).reshape(c, n * p)
    if n_pad != n:
        x_cnp = jnp.pad(x_cnp, ((0, 0), (0, (n_pad - n) * p)))
    x_cnp = x_cnp.astype(jnp.float32)

    # Tiny one-off weight layouts.
    w1t = jnp.transpose(w1).astype(jnp.float32)            # (HID, C)
    b1c = jnp.reshape(b1, (hid, 1)).astype(jnp.float32)    # (HID, 1)
    w2f = w2.astype(jnp.float32)                           # (HID, NCLS)
    b2r = jnp.reshape(b2, (1, ncls)).astype(jnp.float32)   # (1, NCLS)

    # Block-diagonal average-pool matrix: pool[k, b] = 1/P if pixel k belongs to sample b.
    row_sample = jnp.arange(b_tile * p, dtype=jnp.int32) // p
    pool_mat = ((row_sample[:, None] == jnp.arange(b_tile, dtype=jnp.int32)[None, :])
                .astype(jnp.float32) * (1.0 / p))           # (B_TILE*P, B_TILE)

    flops = (2 * n_pad * p * c * hid            # conv
             + 2 * n_pad * p * hid * b_tile     # pooling matmul (per tile K=B_TILE*P)
             + 2 * n_pad * hid * ncls)          # fc head
    bytes_accessed = (n_pad * c * p * 4                       # f32 image
                      + (hid * c + hid + hid * ncls + ncls) * 4
                      + n_tiles * b_tile * p * b_tile * 4     # pool matrix re-reads
                      + n_pad * ncls * 4)                     # f32 logits out

    out = pl.pallas_call(
        _classifier_kernel,
        out_shape=jax.ShapeDtypeStruct((n_pad, ncls), jnp.float32),
        grid_spec=pl.GridSpec(
            grid=(n_tiles,),
            in_specs=[
                pl.BlockSpec((c, b_tile * p), lambda i: (0, i)),
                pl.BlockSpec((hid, c), lambda i: (0, 0)),
                pl.BlockSpec((hid, 1), lambda i: (0, 0)),
                pl.BlockSpec((b_tile * p, b_tile), lambda i: (0, 0)),
                pl.BlockSpec((hid, ncls), lambda i: (0, 0)),
                pl.BlockSpec((1, ncls), lambda i: (0, 0)),
            ],
            out_specs=pl.BlockSpec((b_tile, ncls), lambda i: (i, 0)),
        ),
        compiler_params=pltpu.CompilerParams(
            dimension_semantics=("parallel",)),
        cost_estimate=pl.CostEstimate(
            flops=flops, transcendentals=0, bytes_accessed=bytes_accessed),
    )(x_cnp, w1t, b1c, pool_mat, w2f, b2r)

    return out[:n] if n_pad != n else out


def classifier_ir_infer(data, params):
    """Forward pass equivalent of ClassifierIrInfer.forward."""
    w1, b1, w2, b2 = params
    # ir_model's (N, NCLS, 1, 1) output and the wrapper's .squeeze(-1).squeeze(-1)
    # cancel; the kernel emits (N, NCLS) directly.
    outputs = _ir_model_pallas(data["img"], w1, b1, w2, b2)
    target = data.get("labels", None)
    if target is not None:
        return (outputs, target)
    return outputs


def _reference(data, params):
    """Pure-JAX f32 reference of the synthetic ir_model + squeeze, for validation."""
    w1, b1, w2, b2 = params
    x = data["img"]
    n, c, h, w = x.shape
    x_npc = jnp.transpose(x, (0, 2, 3, 1)).reshape(n, h * w, c)
    hdn = jnp.maximum(jnp.einsum("npc,ck->npk", x_npc, w1) + b1, 0.0)
    pooled = jnp.mean(hdn, axis=1)  # (N, HID)
    logits = pooled @ w2 + b2[0]
    return logits


if __name__ == "__main__":
    key = jax.random.PRNGKey(0)
    k_img, k_w1, k_b1, k_w2, k_b2, k_lbl = jax.random.split(key, 6)

    # Small shapes consistent with an image classifier forward.
    N, C, H, W = 2, 4, 16, 16
    HIDDEN = 32
    NUM_CLASSES = 8

    img = jax.random.normal(k_img, (N, C, H, W), dtype=jnp.float32)
    labels = jax.random.randint(k_lbl, (N,), 0, NUM_CLASSES, dtype=jnp.int32)

    # Deterministic synthetic ir_model parameters (not a checkpoint load).
    # TODO(synk): the real ClassifierIrInfer wraps an opaque compiled hbir model loaded
    # from disk; a tiny conv->pool->fc classifier is synthesized in its place.
    w1 = 0.1 * jax.random.normal(k_w1, (C, HIDDEN), dtype=jnp.float32)
    b1 = 0.1 * jax.random.normal(k_b1, (1, HIDDEN), dtype=jnp.float32)
    w2 = 0.1 * jax.random.normal(k_w2, (HIDDEN, NUM_CLASSES), dtype=jnp.float32)
    b2 = 0.1 * jax.random.normal(k_b2, (1, NUM_CLASSES), dtype=jnp.float32)
    params = (w1, b1, w2, b2)

    data = {"img": img, "labels": labels}

    outputs, target = classifier_ir_infer(data, params)
    outputs = jax.block_until_ready(outputs)
    assert outputs.shape == (N, NUM_CLASSES), outputs.shape
    assert target.shape == (N,), target.shape

    # Also check the no-labels branch (returns bare outputs).
    outputs_only = classifier_ir_infer({"img": img}, params)
    outputs_only = jax.block_until_ready(outputs_only)
    assert outputs_only.shape == (N, NUM_CLASSES)

    # Correctness vs pure-JAX f32 reference (all-f32 kernel -> tight tolerance).
    ref = _reference(data, params)
    assert jnp.allclose(outputs, ref, atol=1e-4, rtol=1e-4), (
        "mismatch vs reference", float(jnp.max(jnp.abs(outputs - ref))))

    print("KERNEL_OK")
</pallas_src>

<mosaic_0001>
module attributes {stable_mosaic.version = 11 : i64} {
  func.func @_classifier_kernel(%arg0: i32, %arg1: memref<4x512xf32, #tpu.memory_space<vmem>>, %arg2: memref<32x4xf32, #tpu.memory_space<vmem>>, %arg3: memref<32x1xf32, #tpu.memory_space<vmem>>, %arg4: memref<512x2xf32, #tpu.memory_space<vmem>>, %arg5: memref<32x8xf32, #tpu.memory_space<vmem>>, %arg6: memref<1x8xf32, #tpu.memory_space<vmem>>, %arg7: memref<2x8xf32, #tpu.memory_space<vmem>>) attributes {dimension_semantics = [#tpu.dimension_semantics<parallel>], iteration_bounds = array<i64: 1>, scalar_prefetch = 0 : i64, scratch_operands = 0 : i64, tpu.core_type = #tpu.core_type<tc>, window_params = [{transform_indices = @transform_0, window_bounds = array<i64: 4, 512>}, {pipeline_mode = #tpu.pipeline_mode<synchronous>, transform_indices = @transform_1, window_bounds = array<i64: 32, 4>}, {pipeline_mode = #tpu.pipeline_mode<synchronous>, transform_indices = @transform_2, window_bounds = array<i64: 32, 1>}, {pipeline_mode = #tpu.pipeline_mode<synchronous>, transform_indices = @transform_3, window_bounds = array<i64: 512, 2>}, {pipeline_mode = #tpu.pipeline_mode<synchronous>, transform_indices = @transform_4, window_bounds = array<i64: 32, 8>}, {pipeline_mode = #tpu.pipeline_mode<synchronous>, transform_indices = @transform_5, window_bounds = array<i64: 1, 8>}, {transform_indices = @transform_6, window_bounds = array<i64: 2, 8>}]} {
    %c0 = arith.constant 0 : index
    %c0_0 = arith.constant 0 : index
    %0 = vector.load %arg2[%c0, %c0_0] : memref<32x4xf32, #tpu.memory_space<vmem>>, vector<32x4xf32>
    %c0_1 = arith.constant 0 : index
    %c0_2 = arith.constant 0 : index
    %1 = vector.load %arg1[%c0_1, %c0_2] : memref<4x512xf32, #tpu.memory_space<vmem>>, vector<4x512xf32>
    %cst = arith.constant dense<0.000000e+00> : vector<32x512xf32>
    %2 = tpu.matmul %0, %1, %cst {dimension_numbers = #tpu.dot_dimension_numbers<[1], [0], [0], [1], [0, 0, 1, 1], [], []>} : vector<32x4xf32>, vector<4x512xf32>, vector<32x512xf32> -> vector<32x512xf32>
    %c0_3 = arith.constant 0 : index
    %c0_4 = arith.constant 0 : index
    %3 = vector.load %arg3[%c0_3, %c0_4] : memref<32x1xf32, #tpu.memory_space<vmem>>, vector<32x1xf32>
    %4 = vector.broadcast %3 : vector<32x1xf32> to vector<32x512xf32>
    %5 = arith.addf %2, %4 : vector<32x512xf32>
    %cst_5 = arith.constant 0.000000e+00 : f32
    %6 = vector.broadcast %cst_5 : f32 to vector<32x512xf32>
    %7 = arith.maximumf %5, %6 : vector<32x512xf32>
    %c0_6 = arith.constant 0 : index
    %c0_7 = arith.constant 0 : index
    %8 = vector.load %arg4[%c0_6, %c0_7] : memref<512x2xf32, #tpu.memory_space<vmem>>, vector<512x2xf32>
    %cst_8 = arith.constant dense<0.000000e+00> : vector<32x2xf32>
    %9 = tpu.matmul %7, %8, %cst_8 {dimension_numbers = #tpu.dot_dimension_numbers<[1], [0], [0], [1], [0, 0, 1, 1], [], []>} : vector<32x512xf32>, vector<512x2xf32>, vector<32x2xf32> -> vector<32x2xf32>
    %c0_9 = arith.constant 0 : index
    %c0_10 = arith.constant 0 : index
    %10 = vector.load %arg5[%c0_9, %c0_10] : memref<32x8xf32, #tpu.memory_space<vmem>>, vector<32x8xf32>
    %cst_11 = arith.constant dense<0.000000e+00> : vector<2x8xf32>
    %11 = tpu.matmul %9, %10, %cst_11 {dimension_numbers = #tpu.dot_dimension_numbers<[0], [0], [1], [1], [0, 1, 1, 1], [], []>} : vector<32x2xf32>, vector<32x8xf32>, vector<2x8xf32> -> vector<2x8xf32>
    %c0_12 = arith.constant 0 : index
    %c0_13 = arith.constant 0 : index
    %12 = vector.load %arg6[%c0_12, %c0_13] : memref<1x8xf32, #tpu.memory_space<vmem>>, vector<1x8xf32>
    %13 = vector.broadcast %12 : vector<1x8xf32> to vector<2x8xf32>
    %14 = arith.addf %11, %13 : vector<2x8xf32>
    %c0_14 = arith.constant 0 : index
    %c0_15 = arith.constant 0 : index
    %15 = vector.load %arg7[%c0_14, %c0_15] : memref<2x8xf32, #tpu.memory_space<vmem>>, vector<2x8xf32>
    tpu.vector_store %arg7[%c0_14, %c0_15], %14 {strides = array<i32>} : memref<2x8xf32, #tpu.memory_space<vmem>>, vector<2x8xf32>,
    return
  }
  func.func @transform_0(%arg0: i32) -> (i32, i32) {
    %c0_i32 = arith.constant 0 : i32
    %c0_i32_0 = arith.constant 0 : i32
    return %c0_i32, %arg0 : i32, i32
  }
  func.func @transform_1(%arg0: i32) -> (i32, i32) {
    %c0_i32 = arith.constant 0 : i32
    %c0_i32_0 = arith.constant 0 : i32
    %c0_i32_1 = arith.constant 0 : i32
    return %c0_i32, %c0_i32_0 : i32, i32
  }
  func.func @transform_2(%arg0: i32) -> (i32, i32) {
    %c0_i32 = arith.constant 0 : i32
    %c0_i32_0 = arith.constant 0 : i32
    %c0_i32_1 = arith.constant 0 : i32
    return %c0_i32, %c0_i32_0 : i32, i32
  }
  func.func @transform_3(%arg0: i32) -> (i32, i32) {
    %c0_i32 = arith.constant 0 : i32
    %c0_i32_0 = arith.constant 0 : i32
    %c0_i32_1 = arith.constant 0 : i32
    return %c0_i32, %c0_i32_0 : i32, i32
  }
  func.func @transform_4(%arg0: i32) -> (i32, i32) {
    %c0_i32 = arith.constant 0 : i32
    %c0_i32_0 = arith.constant 0 : i32
    %c0_i32_1 = arith.constant 0 : i32
    return %c0_i32, %c0_i32_0 : i32, i32
  }
  func.func @transform_5(%arg0: i32) -> (i32, i32) {
    %c0_i32 = arith.constant 0 : i32
    %c0_i32_0 = arith.constant 0 : i32
    %c0_i32_1 = arith.constant 0 : i32
    return %c0_i32, %c0_i32_0 : i32, i32
  }
  func.func @transform_6(%arg0: i32) -> (i32, i32) {
    %c0_i32 = arith.constant 0 : i32
    %c0_i32_0 = arith.constant 0 : i32
    return %arg0, %c0_i32 : i32, i32
  }
}

</mosaic_0001>

<llo_original>
// kernel: _ir_model_pallas.1
$region0: #{_ir_model_pallas.1}
  #allocation0 [shape = 'u32[]', space=smem, size = 0x4, offset = 0x4, fixed_abs, tag = 'smem constant byte address 0x4 - core index']
  #allocation1 [shape = 'u32[144,128]{1,0:T(1,128)}', space=vmem, size = 0x12000, scoped, tag = 'internal scratch']
  %s0 = inlined_call_operand.vmem [shape: f32[4,512], index: 0, kind: input, shape index: {}]
  %s1 = inlined_call_operand.vmem [shape: f32[32,4], index: 1, kind: input, shape index: {}]
  %s2 = inlined_call_operand.vmem [shape: f32[32,1], index: 2, kind: input, shape index: {}]
  %s3 = inlined_call_operand.vmem [shape: f32[512,2], index: 3, kind: input, shape index: {}]
  %s4 = inlined_call_operand.vmem [shape: f32[32,8], index: 4, kind: input, shape index: {}]
  %s5 = inlined_call_operand.vmem [shape: f32[1,8], index: 5, kind: input, shape index: {}]
  %s6 = inlined_call_operand.hbm [shape: f32[2,8], index: 6, kind: output, shape index: {}]
  %s7 = sld [smem:[#allocation0]]
  $region34: #{_ir_model_pallas.1} parent=0
    _
  %s9 = ssub.s32 1, %s7
  %s10 = scalar_select 0, %s9, %s7
  $region1: #{_ir_model_pallas.1} parent=0
    #allocation2 [shape = 'u8[1024]{0}', space=vmem, size = 0x400, scoped, tag = 'output window, operand 0, single buffered']
    #allocation3 [shape = 's32[1]{0}', space=sflag, size = 0x4, scoped, tag = 'scoped memory for _ir_model_pallas.1']
    %11 = vsyncpa [#allocation3], 0
    // Predicated region
    $region2: #{_ir_model_pallas.1} parent=1 // pred_check
      _
    $region3: #{_ir_model_pallas.1} parent=1 // pred_check_branch
      %13 = sbr.rel (0) target = $region5
    $region4: #{_ir_model_pallas.1} parent=1 // pred_region
      _
    $region5: #{_ir_model_pallas.1} parent=1 // pred_fallthru
      _
    // Predicated region
    $region6: #{_ir_model_pallas.1} parent=1 // pred_check
      _
    $region7: #{_ir_model_pallas.1} parent=1 // pred_check_branch
      %15 = sbr.rel (0) target = $region9
    $region8: #{_ir_model_pallas.1} parent=1 // pred_region
      _
    $region9: #{_ir_model_pallas.1} parent=1 // pred_fallthru
      _
    // Predicated region
    $region10: #{_ir_model_pallas.1} parent=1 // pred_check
      _
    $region11: #{_ir_model_pallas.1} parent=1 // pred_check_branch
      %17 = sbr.rel (0) target = $region13
    $region12: #{_ir_model_pallas.1} parent=1 // pred_region
      _
    $region13: #{_ir_model_pallas.1} parent=1 // pred_fallthru
      _
    // Predicated region
    $region14: #{_ir_model_pallas.1} parent=1 // pred_check
      _
    $region15: #{_ir_model_pallas.1} parent=1 // pred_check_branch
      %19 = sbr.rel (0) target = $region17
    $region16: #{_ir_model_pallas.1} parent=1 // pred_region
      _
    $region17: #{_ir_model_pallas.1} parent=1 // pred_fallthru
      _
    // Predicated region
    $region18: #{_ir_model_pallas.1} parent=1 // pred_check
      _
    $region19: #{_ir_model_pallas.1} parent=1 // pred_check_branch
      %21 = sbr.rel (0) target = $region21
    $region20: #{_ir_model_pallas.1} parent=1 // pred_region
      _
    $region21: #{_ir_model_pallas.1} parent=1 // pred_fallthru
      _
    // Predicated region
    $region22: #{_ir_model_pallas.1} parent=1 // pred_check
      _
    $region23: #{_ir_model_pallas.1} parent=1 // pred_check_branch
      %23 = sbr.rel (0) target = $region25
    $region24: #{_ir_model_pallas.1} parent=1 // pred_region
      _
    $region25: #{_ir_model_pallas.1} parent=1 // pred_fallthru
      _
    %v24 = vld [vmem:[%s1] sm:$0xff]
    %v25 = vld [vmem:[%s1 + $0x8] sm:$0xff]
    %v26 = vld [vmem:[%s1 + $0x10] sm:$0xff]
    %v27 = vld [vmem:[%s1 + $0x18] sm:$0xff]
    %v28 = vld [vmem:[%s0] sm:$0xff]
    %v29 = vld [vmem:[%s0 + $0x8] sm:$0xff]
    %v30 = vld [vmem:[%s2] sm:$0xff]
    %v31 = vld [vmem:[%s2 + $0x8] sm:$0xff]
    %v32 = vld [vmem:[%s2 + $0x10] sm:$0xff]
    %v33 = vld [vmem:[%s2 + $0x18] sm:$0xff]
    %35 = vset.pattern.permute.xlu0 0
    %36 = vperm.xlu0 %35, %v30
    %v37 = vpop.permute.xlu0 %36
    %40 = vset.pattern.permute.xlu0 0
    %41 = vperm.xlu0 %40, %v31
    %v42 = vpop.permute.xlu0 %41
    %45 = vset.pattern.permute.xlu0 0
    %46 = vperm.xlu0 %45, %v32
    %v47 = vpop.permute.xlu0 %46
    %50 = vset.pattern.permute.xlu0 0
    %51 = vperm.xlu0 %50, %v33
    %v52 = vpop.permute.xlu0 %51
    %v56 = vcombine.high %v28, %v28
    %v57 = vcombine.high %v29, %v29
    %vm58 = vcmask 31744
    %v60 = vsel %vm58, %v24, 0
    %v63 = vsel %vm58, %v25, 0
    %v66 = vsel %vm58, %v26, 0
    %v69 = vsel %vm58, %v27, 0
    %vm71 = vcmask 1043456
    %v72 = vsel %vm71, %v28, 0
    %v74 = vsel %vm71, %v56, 0
    %v76 = vsel %vm71, %v29, 0
    %v78 = vsel %vm71, %v57, 0
    %80 = vmatprep.subr.mxu0 0.0
    %81 = vmatpush1.msra.mxu0 0.0
    %82 = vmatprep.subr.mxu0 0.0
    %83 = vmatpush1.msra.mxu0 0.0
    %84 = vmatprep.subr.mxu0 0.0
    %85 = vmatpush1.msra.mxu0 0.0
    %86 = vmatprep.subr.mxu0 0.0
    %87 = vmatpush1.msra.mxu0 0.0
    %88 = vmatprep.subr.mxu0 0.0
    %89 = vmatpush1.msra.mxu0 0.0
    %90 = vmatprep.subr.mxu0 0.0
    %91 = vmatpush1.msra.mxu0 0.0
    %92 = vmatprep.subr.mxu0 0.0
    %93 = vmatpush1.msra.mxu0 0.0
    %94 = vmatprep.subr.mxu0 0.0
    %95 = vmatpush1.msra.mxu0 0.0
    %96 = vmatprep.subr.mxu0 0.0
    %97 = vmatpush1.msra.mxu0 0.0
    %98 = vmatprep.subr.mxu0 0.0
    %99 = vmatpush1.msra.mxu0 0.0
    %100 = vmatprep.subr.mxu0 0.0
    %101 = vmatpush1.msra.mxu0 0.0
    %102 = vmatprep.subr.mxu0 0.0
    %103 = vmatpush1.msra.mxu0 0.0
    %104 = vmatprep.subr.mxu0 0.0
    %105 = vmatpush1.msra.mxu0 0.0
    %106 = vmatprep.subr.mxu0 0.0
    %107 = vmatpush1.msra.mxu0 0.0
    %108 = vmatprep.subr.mxu0 0.0
    %109 = vmatpush1.msra.mxu0 0.0
    %110 = vmatprep.subr.mxu0 %v74
    %111 = vmatpush1.msra.mxu0 %v72
    %112 = vmatprep.subr.mxu0 0.0
    %113 = vmatpush2.msra.mxu0 0.0
    %114 = vmatprep.subr.mxu0 0.0
    %115 = vmatpush2.msra.mxu0 0.0
    %116 = vmatprep.subr.mxu0 0.0
    %117 = vmatpush2.msra.mxu0 0.0
    %118 = vmatprep.subr.mxu0 0.0
    %119 = vmatpush2.msra.mxu0 0.0
    %120 = vmatprep.subr.mxu0 0.0
    %121 = vmatpush2.msra.mxu0 0.0
    %122 = vmatprep.subr.mxu0 0.0
    %123 = vmatpush2.msra.mxu0 0.0
    %124 = vmatprep.subr.mxu0 0.0
    %125 = vmatpush2.msra.mxu0 0.0
    %126 = vmatprep.subr.mxu0 0.0
    %127 = vmatpush2.msra.mxu0 0.0
    %128 = vmatprep.subr.mxu0 0.0
    %129 = vmatpush2.msra.mxu0 0.0
    %130 = vmatprep.subr.mxu0 0.0
    %131 = vmatpush2.msra.mxu0 0.0
    %132 = vmatprep.subr.mxu0 0.0
    %133 = vmatpush2.msra.mxu0 0.0
    %134 = vmatprep.subr.mxu0 0.0
    %135 = vmatpush2.msra.mxu0 0.0
    %136 = vmatprep.subr.mxu0 0.0
    %137 = vmatpush2.msra.mxu0 0.0
    %138 = vmatprep.subr.mxu0 0.0
    %139 = vmatpush2.msra.mxu0 0.0
    %140 = vmatprep.subr.mxu0 0.0
    %141 = vmatpush2.msra.mxu0 0.0
    %142 = vmatprep.subr.mxu0 0.0
    %143 = vmatpush2.msra.mxu0 0.0
    %144 = vmatprep.mubr.f32.mxu0 0.0
    %145 = vmatmul.mubr.f32.gmra.mxu0 %v60
    %v146 = vpop.f32.mrf.mxu0
    %v147 = vadd.f32 %v37, %v146
    %v148 = vpop.f32.mrf.mxu0
    %v149 = vadd.f32 %v37, %v148
    %150 = vmatprep.mubr.f32.mxu0 0.0
    %151 = vmatmul.mubr.f32.gmra.mxu0 %v63
    %v152 = vpop.f32.mrf.mxu0
    %v153 = vadd.f32 %v42, %v152
    %v154 = vpop.f32.mrf.mxu0
    %v155 = vadd.f32 %v42, %v154
    %156 = vmatprep.mubr.f32.mxu0 0.0
    %157 = vmatmul.mubr.f32.gmra.mxu0 %v66
    %v158 = vpop.f32.mrf.mxu0
    %v159 = vadd.f32 %v47, %v158
    %v160 = vpop.f32.mrf.mxu0
    %v161 = vadd.f32 %v47, %v160
    %162 = vmatprep.mubr.f32.mxu0 0.0
    %163 = vmatmul.mubr.f32.gmra.mxu0 %v69
    %v164 = vpop.f32.mrf.mxu0
    %v165 = vadd.f32 %v52, %v164
    %v166 = vpop.f32.mrf.mxu0
    %v167 = vadd.f32 %v52, %v166
    %168 = vdwg.mxu0
    %169 = vmatprep.subr.mxu0 0.0
    %170 = vmatpush1.msra.mxu0 0.0
    %171 = vmatprep.subr.mxu0 0.0
    %172 = vmatpush1.msra.mxu0 0.0
    %173 = vmatprep.subr.mxu0 0.0
    %174 = vmatpush1.msra.mxu0 0.0
    %175 = vmatprep.subr.mxu0 0.0
    %176 = vmatpush1.msra.mxu0 0.0
    %177 = vmatprep.subr.mxu0 0.0
    %178 = vmatpush1.msra.mxu0 0.0
    %179 = vmatprep.subr.mxu0 0.0
    %180 = vmatpush1.msra.mxu0 0.0
    %181 = vmatprep.subr.mxu0 0.0
    %182 = vmatpush1.msra.mxu0 0.0
    %183 = vmatprep.subr.mxu0 0.0
    %184 = vmatpush1.msra.mxu0 0.0
    %185 = vmatprep.subr.mxu0 0.0
    %186 = vmatpush1.msra.mxu0 0.0
    %187 = vmatprep.subr.mxu0 0.0
    %188 = vmatpush1.msra.mxu0 0.0
    %189 = vmatprep.subr.mxu0 0.0
    %190 = vmatpush1.msra.mxu0 0.0
    %191 = vmatprep.subr.mxu0 0.0
    %192 = vmatpush1.msra.mxu0 0.0
    %193 = vmatprep.subr.mxu0 0.0
    %194 = vmatpush1.msra.mxu0 0.0
    %195 = vmatprep.subr.mxu0 0.0
    %196 = vmatpush1.msra.mxu0 0.0
    %197 = vmatprep.subr.mxu0 0.0
    %198 = vmatpush1.msra.mxu0 0.0
    %199 = vmatprep.subr.mxu0 %v78
    %200 = vmatpush1.msra.mxu0 %v76
    %201 = vmatprep.subr.mxu0 0.0
    %202 = vmatpush2.msra.mxu0 0.0
    %203 = vmatprep.subr.mxu0 0.0
    %204 = vmatpush2.msra.mxu0 0.0
    %205 = vmatprep.subr.mxu0 0.0
    %206 = vmatpush2.msra.mxu0 0.0
    %207 = vmatprep.subr.mxu0 0.0
    %208 = vmatpush2.msra.mxu0 0.0
    %209 = vmatprep.subr.mxu0 0.0
    %210 = vmatpush2.msra.mxu0 0.0
    %211 = vmatprep.subr.mxu0 0.0
    %212 = vmatpush2.msra.mxu0 0.0
    %213 = vmatprep.subr.mxu0 0.0
    %214 = vmatpush2.msra.mxu0 0.0
    %215 = vmatprep.subr.mxu0 0.0
    %216 = vmatpush2.msra.mxu0 0.0
    %217 = vmatprep.subr.mxu0 0.0
    %218 = vmatpush2.msra.mxu0 0.0
    %219 = vmatprep.subr.mxu0 0.0
    %220 = vmatpush2.msra.mxu0 0.0
    %221 = vmatprep.subr.mxu0 0.0
    %222 = vmatpush2.msra.mxu0 0.0
    %223 = vmatprep.subr.mxu0 0.0
    %224 = vmatpush2.msra.mxu0 0.0
    %225 = vmatprep.subr.mxu0 0.0
    %226 = vmatpush2.msra.mxu0 0.0
    %227 = vmatprep.subr.mxu0 0.0
    %228 = vmatpush2.msra.mxu0 0.0
    %229 = vmatprep.subr.mxu0 0.0
    %230 = vmatpush2.msra.mxu0 0.0
    %231 = vmatprep.subr.mxu0 0.0
    %232 = vmatpush2.msra.mxu0 0.0
    %233 = vmatprep.mubr.f32.mxu0 0.0
    %234 = vmatmul.mubr.f32.gmra.mxu0 %v60
    %v235 = vpop.f32.mrf.mxu0
    %v236 = vadd.f32 %v37, %v235
    %v237 = vpop.f32.mrf.mxu0
    %v238 = vadd.f32 %v37, %v237
    %239 = vmatprep.mubr.f32.mxu0 0.0
    %240 = vmatmul.mubr.f32.gmra.mxu0 %v63
    %v241 = vpop.f32.mrf.mxu0
    %v242 = vadd.f32 %v42, %v241
    %v243 = vpop.f32.mrf.mxu0
    %v244 = vadd.f32 %v42, %v243
    %245 = vmatprep.mubr.f32.mxu0 0.0
    %246 = vmatmul.mubr.f32.gmra.mxu0 %v66
    %v247 = vpop.f32.mrf.mxu0
    %v248 = vadd.f32 %v47, %v247
    %v249 = vpop.f32.mrf.mxu0
    %v250 = vadd.f32 %v47, %v249
    %251 = vmatprep.mubr.f32.mxu0 0.0
    %252 = vmatmul.mubr.f32.gmra.mxu0 %v69
    %v253 = vpop.f32.mrf.mxu0
    %v254 = vadd.f32 %v52, %v253
    %v255 = vpop.f32.mrf.mxu0
    %v256 = vadd.f32 %v52, %v255
    %257 = vdwg.mxu0
    %v258 = vmax.f32 %v147, 0.0
    %v259 = vmax.f32 %v149, 0.0
    %v260 = vmax.f32 %v236, 0.0
    %v261 = vmax.f32 %v238, 0.0
    %v262 = vmax.f32 %v153, 0.0
    %v263 = vmax.f32 %v155, 0.0
    %v264 = vmax.f32 %v242, 0.0
    %v265 = vmax.f32 %v244, 0.0
    %v266 = vmax.f32 %v159, 0.0
    %v267 = vmax.f32 %v161, 0.0
    %v268 = vmax.f32 %v248, 0.0
    %v269 = vmax.f32 %v250, 0.0
    %v270 = vmax.f32 %v165, 0.0
    %v271 = vmax.f32 %v167, 0.0
    %v272 = vmax.f32 %v254, 0.0
    %v273 = vmax.f32 %v256, 0.0
    %v274 = vld [vmem:[%s3] sm:$0xff]
    %v275 = vld [vmem:[%s3 + $0x8] sm:$0xff]
    %v276 = vld [vmem:[%s3 + $0x10] sm:$0xff]
    %v277 = vld [vmem:[%s3 + $0x18] sm:$0xff]
    %v278 = vld [vmem:[%s3 + $0x20] sm:$0xff]
    %v279 = vld [vmem:[%s3 + $0x28] sm:$0xff]
    %v280 = vld [vmem:[%s3 + $0x30] sm:$0xff]
    %v281 = vld [vmem:[%s3 + $0x38] sm:$0xff]
    %v282 = vld [vmem:[%s3 + $0x40] sm:$0xff]
    %v283 = vld [vmem:[%s3 + $0x48] sm:$0xff]
    %v284 = vld [vmem:[%s3 + $0x50] sm:$0xff]
    %v285 = vld [vmem:[%s3 + $0x58] sm:$0xff]
    %v286 = vld [vmem:[%s3 + $0x60] sm:$0xff]
    %v287 = vld [vmem:[%s3 + $0x68] sm:$0xff]
    %v288 = vld [vmem:[%s3 + $0x70] sm:$0xff]
    %v289 = vld [vmem:[%s3 + $0x78] sm:$0xff]
    %v290 = vld [vmem:[%s3 + $0x80] sm:$0xff]
    %v291 = vld [vmem:[%s3 + $0x88] sm:$0xff]
    %v292 = vld [vmem:[%s3 + $0x90] sm:$0xff]
    %v293 = vld [vmem:[%s3 + $0x98] sm:$0xff]
    %v294 = vld [vmem:[%s3 + $0xa0] sm:$0xff]
    %v295 = vld [vmem:[%s3 + $0xa8] sm:$0xff]
    %v296 = vld [vmem:[%s3 + $0xb0] sm:$0xff]
    %v297 = vld [vmem:[%s3 + $0xb8] sm:$0xff]
    %v298 = vld [vmem:[%s3 + $0xc0] sm:$0xff]
    %v299 = vld [vmem:[%s3 + $0xc8] sm:$0xff]
    %v300 = vld [vmem:[%s3 + $0xd0] sm:$0xff]
    %v301 = vld [vmem:[%s3 + $0xd8] sm:$0xff]
    %v302 = vld [vmem:[%s3 + $0xe0] sm:$0xff]
    %v303 = vld [vmem:[%s3 + $0xe8] sm:$0xff]
    %v304 = vld [vmem:[%s3 + $0xf0] sm:$0xff]
    %v305 = vld [vmem:[%s3 + $0xf8] sm:$0xff]
    %v306 = vld [vmem:[%s3 + $0x100] sm:$0xff]
    %v307 = vld [vmem:[%s3 + $0x108] sm:$0xff]
    %v308 = vld [vmem:[%s3 + $0x110] sm:$0xff]
    %v309 = vld [vmem:[%s3 + $0x118] sm:$0xff]
    %v310 = vld [vmem:[%s3 + $0x120] sm:$0xff]
    %v311 = vld [vmem:[%s3 + $0x128] sm:$0xff]
    %v312 = vld [vmem:[%s3 + $0x130] sm:$0xff]
    %v313 = vld [vmem:[%s3 + $0x138] sm:$0xff]
    %v314 = vld [vmem:[%s3 + $0x140] sm:$0xff]
    %v315 = vld [vmem:[%s3 + $0x148] sm:$0xff]
    %v316 = vld [vmem:[%s3 + $0x150] sm:$0xff]
    %v317 = vld [vmem:[%s3 + $0x158] sm:$0xff]
    %v318 = vld [vmem:[%s3 + $0x160] sm:$0xff]
    %v319 = vld [vmem:[%s3 + $0x168] sm:$0xff]
    %v320 = vld [vmem:[%s3 + $0x170] sm:$0xff]
    %v321 = vld [vmem:[%s3 + $0x178] sm:$0xff]
    %v322 = vld [vmem:[%s3 + $0x180] sm:$0xff]
    %v323 = vld [vmem:[%s3 + $0x188] sm:$0xff]
    %v324 = vld [vmem:[%s3 + $0x190] sm:$0xff]
    %v325 = vld [vmem:[%s3 + $0x198] sm:$0xff]
    %v326 = vld [vmem:[%s3 + $0x1a0] sm:$0xff]
    %v327 = vld [vmem:[%s3 + $0x1a8] sm:$0xff]
    %v328 = vld [vmem:[%s3 + $0x1b0] sm:$0xff]
    %v329 = vld [vmem:[%s3 + $0x1b8] sm:$0xff]
    %v330 = vld [vmem:[%s3 + $0x1c0] sm:$0xff]
    %v331 = vld [vmem:[%s3 + $0x1c8] sm:$0xff]
    %v332 = vld [vmem:[%s3 + $0x1d0] sm:$0xff]
    %v333 = vld [vmem:[%s3 + $0x1d8] sm:$0xff]
    %v334 = vld [vmem:[%s3 + $0x1e0] sm:$0xff]
    %v335 = vld [vmem:[%s3 + $0x1e8] sm:$0xff]
    %v336 = vld [vmem:[%s3 + $0x1f0] sm:$0xff]
    %v337 = vld [vmem:[%s3 + $0x1f8] sm:$0xff]
    %338 = vmatprep.subr.mxu0 0.0
    %339 = vmatpush1.msra.mxu0 %v289
    %340 = vmatprep.subr.mxu0 0.0
    %341 = vmatpush1.msra.mxu0 %v288
    %342 = vmatprep.subr.mxu0 0.0
    %343 = vmatpush1.msra.mxu0 %v287
    %344 = vmatprep.subr.mxu0 0.0
    %345 = vmatpush1.msra.mxu0 %v286
    %346 = vmatprep.subr.mxu0 0.0
    %347 = vmatpush1.msra.mxu0 %v285
    %348 = vmatprep.subr.mxu0 0.0
    %349 = vmatpush1.msra.mxu0 %v284
    %350 = vmatprep.subr.mxu0 0.0
    %351 = vmatpush1.msra.mxu0 %v283
    %352 = vmatprep.subr.mxu0 0.0
    %353 = vmatpush1.msra.mxu0 %v282
    %354 = vmatprep.subr.mxu0 0.0
    %355 = vmatpush1.msra.mxu0 %v281
    %356 = vmatprep.subr.mxu0 0.0
    %357 = vmatpush1.msra.mxu0 %v280
    %358 = vmatprep.subr.mxu0 0.0
    %359 = vmatpush1.msra.mxu0 %v279
    %360 = vmatprep.subr.mxu0 0.0
    %361 = vmatpush1.msra.mxu0 %v278
    %362 = vmatprep.subr.mxu0 0.0
    %363 = vmatpush1.msra.mxu0 %v277
    %364 = vmatprep.subr.mxu0 0.0
    %365 = vmatpush1.msra.mxu0 %v276
    %366 = vmatprep.subr.mxu0 0.0
    %367 = vmatpush1.msra.mxu0 %v275
    %368 = vmatprep.subr.mxu0 0.0
    %369 = vmatpush1.msra.mxu0 %v274
    %370 = vmatprep.subr.mxu0 0.0
    %371 = vmatpush2.msra.mxu0 %v305
    %372 = vmatprep.subr.mxu0 0.0
    %373 = vmatpush2.msra.mxu0 %v304
    %374 = vmatprep.subr.mxu0 0.0
    %375 = vmatpush2.msra.mxu0 %v303
    %376 = vmatprep.subr.mxu0 0.0
    %377 = vmatpush2.msra.mxu0 %v302
    %378 = vmatprep.subr.mxu0 0.0
    %379 = vmatpush2.msra.mxu0 %v301
    %380 = vmatprep.subr.mxu0 0.0
    %381 = vmatpush2.msra.mxu0 %v300
    %382 = vmatprep.subr.mxu0 0.0
    %383 = vmatpush2.msra.mxu0 %v299
    %384 = vmatprep.subr.mxu0 0.0
    %385 = vmatpush2.msra.mxu0 %v298
    %386 = vmatprep.subr.mxu0 0.0
    %387 = vmatpush2.msra.mxu0 %v297
    %388 = vmatprep.subr.mxu0 0.0
    %389 = vmatpush2.msra.mxu0 %v296
    %390 = vmatprep.subr.mxu0 0.0
    %391 = vmatpush2.msra.mxu0 %v295
    %392 = vmatprep.subr.mxu0 0.0
    %393 = vmatpush2.msra.mxu0 %v294
    %394 = vmatprep.subr.mxu0 0.0
    %395 = vmatpush2.msra.mxu0 %v293
    %396 = vmatprep.subr.mxu0 0.0
    %397 = vmatpush2.msra.mxu0 %v292
    %398 = vmatprep.subr.mxu0 0.0
    %399 = vmatpush2.msra.mxu0 %v291
    %400 = vmatprep.subr.mxu0 0.0
    %401 = vmatpush2.msra.mxu0 %v290
    %402 = vmatprep.mubr.f32.mxu0 %v259
    %403 = vmatmul.mubr.f32.gmra.mxu0 %v258
    %v404 = vpop.f32.mrf.mxu0
    %v405 = vadd.f32 0.0, %v404
    %v406 = vpop.f32.mrf.mxu0
    %407 = vmatprep.mubr.f32.mxu0 %v263
    %408 = vmatmul.mubr.f32.gmra.mxu0 %v262
    %v409 = vpop.f32.mrf.mxu0
    %v410 = vadd.f32 0.0, %v409
    %v411 = vpop.f32.mrf.mxu0
    %412 = vmatprep.mubr.f32.mxu0 %v267
    %413 = vmatmul.mubr.f32.gmra.mxu0 %v266
    %v414 = vpop.f32.mrf.mxu0
    %v415 = vadd.f32 0.0, %v414
    %v416 = vpop.f32.mrf.mxu0
    %417 = vmatprep.mubr.f32.mxu0 %v271
    %418 = vmatmul.mubr.f32.gmra.mxu0 %v270
    %v419 = vpop.f32.mrf.mxu0
    %v420 = vadd.f32 0.0, %v419
    %v421 = vpop.f32.mrf.mxu0
    %422 = vdwg.mxu0
    %423 = vmatprep.subr.mxu0 0.0
    %424 = vmatpush1.msra.mxu0 %v321
    %425 = vmatprep.subr.mxu0 0.0
    %426 = vmatpush1.msra.mxu0 %v320
    %427 = vmatprep.subr.mxu0 0.0
    %428 = vmatpush1.msra.mxu0 %v319
    %429 = vmatprep.subr.mxu0 0.0
    %430 = vmatpush1.msra.mxu0 %v318
    %431 = vmatprep.subr.mxu0 0.0
    %432 = vmatpush1.msra.mxu0 %v317
    %433 = vmatprep.subr.mxu0 0.0
    %434 = vmatpush1.msra.mxu0 %v316
    %435 = vmatprep.subr.mxu0 0.0
    %436 = vmatpush1.msra.mxu0 %v315
    %437 = vmatprep.subr.mxu0 0.0
    %438 = vmatpush1.msra.mxu0 %v314
    %439 = vmatprep.subr.mxu0 0.0
    %440 = vmatpush1.msra.mxu0 %v313
    %441 = vmatprep.subr.mxu0 0.0
    %442 = vmatpush1.msra.mxu0 %v312
    %443 = vmatprep.subr.mxu0 0.0
    %444 = vmatpush1.msra.mxu0 %v311
    %445 = vmatprep.subr.mxu0 0.0
    %446 = vmatpush1.msra.mxu0 %v310
    %447 = vmatprep.subr.mxu0 0.0
    %448 = vmatpush1.msra.mxu0 %v309
    %449 = vmatprep.subr.mxu0 0.0
    %450 = vmatpush1.msra.mxu0 %v308
    %451 = vmatprep.subr.mxu0 0.0
    %452 = vmatpush1.msra.mxu0 %v307
    %453 = vmatprep.subr.mxu0 0.0
    %454 = vmatpush1.msra.mxu0 %v306
    %455 = vmatprep.subr.mxu0 0.0
    %456 = vmatpush2.msra.mxu0 %v337
    %457 = vmatprep.subr.mxu0 0.0
    %458 = vmatpush2.msra.mxu0 %v336
    %459 = vmatprep.subr.mxu0 0.0
    %460 = vmatpush2.msra.mxu0 %v335
    %461 = vmatprep.subr.mxu0 0.0
    %462 = vmatpush2.msra.mxu0 %v334
    %463 = vmatprep.subr.mxu0 0.0
    %464 = vmatpush2.msra.mxu0 %v333
    %465 = vmatprep.subr.mxu0 0.0
    %466 = vmatpush2.msra.mxu0 %v332
    %467 = vmatprep.subr.mxu0 0.0
    %468 = vmatpush2.msra.mxu0 %v331
    %469 = vmatprep.subr.mxu0 0.0
    %470 = vmatpush2.msra.mxu0 %v330
    %471 = vmatprep.subr.mxu0 0.0
    %472 = vmatpush2.msra.mxu0 %v329
    %473 = vmatprep.subr.mxu0 0.0
    %474 = vmatpush2.msra.mxu0 %v328
    %475 = vmatprep.subr.mxu0 0.0
    %476 = vmatpush2.msra.mxu0 %v327
    %477 = vmatprep.subr.mxu0 0.0
    %478 = vmatpush2.msra.mxu0 %v326
    %479 = vmatprep.subr.mxu0 0.0
    %480 = vmatpush2.msra.mxu0 %v325
    %481 = vmatprep.subr.mxu0 0.0
    %482 = vmatpush2.msra.mxu0 %v324
    %483 = vmatprep.subr.mxu0 0.0
    %484 = vmatpush2.msra.mxu0 %v323
    %485 = vmatprep.subr.mxu0 0.0
    %486 = vmatpush2.msra.mxu0 %v322
    %487 = vmatprep.mubr.f32.mxu0 %v261
    %488 = vmatmul.mubr.f32.gmra.mxu0 %v260
    %v489 = vpop.f32.mrf.mxu0
    %v490 = vadd.f32 %v405, %v489
    %v491 = vpop.f32.mrf.mxu0
    %492 = vmatprep.mubr.f32.mxu0 %v265
    %493 = vmatmul.mubr.f32.gmra.mxu0 %v264
    %v494 = vpop.f32.mrf.mxu0
    %v495 = vadd.f32 %v410, %v494
    %v496 = vpop.f32.mrf.mxu0
    %497 = vmatprep.mubr.f32.mxu0 %v269
    %498 = vmatmul.mubr.f32.gmra.mxu0 %v268
    %v499 = vpop.f32.mrf.mxu0
    %v500 = vadd.f32 %v415, %v499
    %v501 = vpop.f32.mrf.mxu0
    %502 = vmatprep.mubr.f32.mxu0 %v273
    %503 = vmatmul.mubr.f32.gmra.mxu0 %v272
    %v504 = vpop.f32.mrf.mxu0
    %v505 = vadd.f32 %v420, %v504
    %v506 = vpop.f32.mrf.mxu0
    %507 = vdwg.mxu0
    %v508 = vld [vmem:[%s4] sm:$0xff]
    %v509 = vld [vmem:[%s4 + $0x8] sm:$0xff]
    %v510 = vld [vmem:[%s4 + $0x10] sm:$0xff]
    %v511 = vld [vmem:[%s4 + $0x18] sm:$0xff]
    %v512 = vld [vmem:[%s5] sm:$0x1]
    %v514 = vlaneseq
    %v515 = vshrl.u32 %v514, 7
    %v516 = vsub.s32 0, %v515
    %v517 = vrot.slane %v512, %v516
    %519 = vxpose.xlu0.b32.start [1/16] %v490, 128
    %520 = vxpose.xlu0.b32.cont [2/16] %v495, 128
    %521 = vxpose.xlu0.b32.cont [3/16] %v500, 128
    %522 = vxpose.xlu0.b32.cont [4/16] %v505, 128
    %523 = vxpose.xlu0.b32.cont [5/16] 0.0, 128
    %524 = vxpose.xlu0.b32.cont [6/16] 0.0, 128
    %525 = vxpose.xlu0.b32.cont [7/16] 0.0, 128
    %526 = vxpose.xlu0.b32.cont [8/16] 0.0, 128
    %527 = vxpose.xlu0.b32.cont [9/16] 0.0, 128
    %528 = vxpose.xlu0.b32.cont [10/16] 0.0, 128
    %529 = vxpose.xlu0.b32.cont [11/16] 0.0, 128
    %530 = vxpose.xlu0.b32.cont [12/16] 0.0, 128
    %531 = vxpose.xlu0.b32.cont [13/16] 0.0, 128
    %532 = vxpose.xlu0.b32.cont [14/16] 0.0, 128
    %533 = vxpose.xlu0.b32.cont [15/16] 0.0, 128
    %534 = vxpose.xlu0.b32.end [16/16] 0.0, 128
    %v535 = vpop.trf.xlu0
    %v536 = vpop.trf.xlu0
    %v537 = vpop.trf.xlu0
    %v538 = vpop.trf.xlu0
    %v539 = vpop.trf.xlu0
    %v540 = vpop.trf.xlu0
    %v541 = vpop.trf.xlu0
    %v542 = vpop.trf.xlu0
    %v543 = vpop.trf.xlu0
    %v544 = vpop.trf.xlu0
    %v545 = vpop.trf.xlu0
    %v546 = vpop.trf.xlu0
    %v547 = vpop.trf.xlu0
    %v548 = vpop.trf.xlu0
    %v549 = vpop.trf.xlu0
    %v550 = vpop.trf.xlu0
    %vm551 = vcmask 261120
    %v553 = vsel %vm551, %v535, 0
    %555 = vmatprep.subr.mxu0 0.0
    %556 = vmatpush1.msra.mxu0 0.0
    %557 = vmatprep.subr.mxu0 0.0
    %558 = vmatpush1.msra.mxu0 0.0
    %559 = vmatprep.subr.mxu0 0.0
    %560 = vmatpush1.msra.mxu0 0.0
    %561 = vmatprep.subr.mxu0 0.0
    %562 = vmatpush1.msra.mxu0 0.0
    %563 = vmatprep.subr.mxu0 0.0
    %564 = vmatpush1.msra.mxu0 0.0
    %565 = vmatprep.subr.mxu0 0.0
    %566 = vmatpush1.msra.mxu0 0.0
    %567 = vmatprep.subr.mxu0 0.0
    %568 = vmatpush1.msra.mxu0 0.0
    %569 = vmatprep.subr.mxu0 0.0
    %570 = vmatpush1.msra.mxu0 0.0
    %571 = vmatprep.subr.mxu0 0.0
    %572 = vmatpush1.msra.mxu0 0.0
    %573 = vmatprep.subr.mxu0 0.0
    %574 = vmatpush1.msra.mxu0 0.0
    %575 = vmatprep.subr.mxu0 0.0
    %576 = vmatpush1.msra.mxu0 0.0
    %577 = vmatprep.subr.mxu0 0.0
    %578 = vmatpush1.msra.mxu0 0.0
    %579 = vmatprep.subr.mxu0 0.0
    %580 = vmatpush1.msra.mxu0 %v511
    %581 = vmatprep.subr.mxu0 0.0
    %582 = vmatpush1.msra.mxu0 %v510
    %583 = vmatprep.subr.mxu0 0.0
    %584 = vmatpush1.msra.mxu0 %v509
    %585 = vmatprep.subr.mxu0 0.0
    %586 = vmatpush1.msra.mxu0 %v508
    %587 = vmatprep.subr.mxu0 0.0
    %588 = vmatpush2.msra.mxu0 0.0
    %589 = vmatprep.subr.mxu0 0.0
    %590 = vmatpush2.msra.mxu0 0.0
    %591 = vmatprep.subr.mxu0 0.0
    %592 = vmatpush2.msra.mxu0 0.0
    %593 = vmatprep.subr.mxu0 0.0
    %594 = vmatpush2.msra.mxu0 0.0
    %595 = vmatprep.subr.mxu0 0.0
    %596 = vmatpush2.msra.mxu0 0.0
    %597 = vmatprep.subr.mxu0 0.0
    %598 = vmatpush2.msra.mxu0 0.0
    %599 = vmatprep.subr.mxu0 0.0
    %600 = vmatpush2.msra.mxu0 0.0
    %601 = vmatprep.subr.mxu0 0.0
    %602 = vmatpush2.msra.mxu0 0.0
    %603 = vmatprep.subr.mxu0 0.0
    %604 = vmatpush2.msra.mxu0 0.0
    %605 = vmatprep.subr.mxu0 0.0
    %606 = vmatpush2.msra.mxu0 0.0
    %607 = vmatprep.subr.mxu0 0.0
    %608 = vmatpush2.msra.mxu0 0.0
    %609 = vmatprep.subr.mxu0 0.0
    %610 = vmatpush2.msra.mxu0 0.0
    %611 = vmatprep.subr.mxu0 0.0
    %612 = vmatpush2.msra.mxu0 0.0
    %613 = vmatprep.subr.mxu0 0.0
    %614 = vmatpush2.msra.mxu0 0.0
    %615 = vmatprep.subr.mxu0 0.0
    %616 = vmatpush2.msra.mxu0 0.0
    %617 = vmatprep.subr.mxu0 0.0
    %618 = vmatpush2.msra.mxu0 0.0
    %619 = vmatprep.mubr.f32.mxu0 0.0
    %620 = vmatmul.mubr.f32.gmra.mxu0 %v553
    %v621 = vpop.f32.mrf.mxu0
    %v622 = vadd.f32 %v517, %v621
    %v623 = vpop.f32.mrf.mxu0
    %624 = vdwg.mxu0
    %vm625 = vcmask 58368
    %626 = vst.msk [vmem:[#allocation2] sm:$0x3] %vm625, %v622
    // Predicated region
    $region26: #{_ir_model_pallas.1} parent=1 // pred_check
      _
    $region27: #{_ir_model_pallas.1} parent=1 // pred_check_branch
      %628 = sbr.rel (0) target = $region29
    $region28: #{_ir_model_pallas.1} parent=1 // pred_region
      %s630 = ssub.s32 32, 32
      %631 = vsyncadd [#allocation3], %s630
      %s633 = sshll.u32 [#allocation2], 4
      %s634 = int_to_ptr.vmem [resolvable:$true] %s633
      %636 = dma.vmem_to_hbm [thread:$0]  %s634, 32, %s6, [#allocation3]
    $region29: #{_ir_model_pallas.1} parent=1 // pred_fallthru
      _
    // Predicated region
    $region30: #{_ir_model_pallas.1} parent=1 // pred_check
      _
    $region31: #{_ir_model_pallas.1} parent=1 // pred_check_branch
      %638 = sbr.rel (0) target = $region33
    $region32: #{_ir_model_pallas.1} parent=1 // pred_region
      %639 = dma.done [#allocation3], 32
    $region33: #{_ir_model_pallas.1} parent=1 // pred_fallthru
      _
    %640 = vsyncpa [#allocation3], 1

</llo_original>
